<compile_context>
chip_gen: v7x
topology: tpu7x:2x2x1
jax: 0.10.0
libtpu: 0.0.40
codegen_flags: <defaults>
</compile_context>

<pallas_src>
import functools

import jax
import jax.numpy as jnp
from jax.experimental import pallas as pl
from jax.experimental.pallas import tpu as pltpu

BN_EPS = 1e-5
_MIB = 1024 * 1024


# ----------------------------- hardware budgets -------------------------------


def _hw_budgets():
    """(vmem_limit_bytes, per-block byte budget) for the local TPU generation."""
    try:
        info = pltpu.get_tpu_info()
        phys = int(getattr(info, "vmem_capacity_bytes", 64 * _MIB))
    except Exception:  # query unavailable -> assume the smallest (v7x) VMEM
        phys = 64 * _MIB
    vmem_limit = phys * 3 // 4               # ~48 MiB on v7x, ~96 MiB v5e/v6e
    block_budget = 2 * _MIB if phys <= 64 * _MIB else 4 * _MIB
    return vmem_limit, block_budget


def _round_up(a, b):
    return (a + b - 1) // b * b


def _pick_tile(hw, c, block_budget_bytes):
    """Largest lane tile (multiple of 128) dividing hw with C*ts*4 <= budget."""
    assert hw % 128 == 0
    max_lanes = (block_budget_bytes // (c * 4)) // 128 * 128
    max_lanes = max(128, min(max_lanes, 32768))
    best = 128
    for t in range(128, min(hw, max_lanes) + 1, 128):
        if hw % t == 0:
            best = t
    return best


# ----------------------------- kernels ----------------------------------------


def _sigmoid_fast(z):
    # exp on the EUP, reciprocal as a single approx EUP rcp (no VALU Newton
    # steps).  ~2^-12 relative error -> covered by the 2e-3 self-test tolerance.
    return pl.reciprocal(1.0 + jnp.exp(-z), approx=True)


def _stats_kernel(x_ref, w1_ref, b1_ref, acc_ref, *, mm_dtype):
    # x_ref: (1, C, ts) -- channels on sublanes, spatial on lanes.
    # acc_ref: (1, 1, C, 8) resident accumulator across the spatial grid axis,
    # packing [sum x, sum x11, sum x11^2, sum x11*x, sum x^2, 0, 0, 0].
    t = pl.program_id(2)
    x = x_ref[0]                                                     # (C, ts)
    z = jnp.dot(w1_ref[...], x.astype(mm_dtype),
                preferred_element_type=jnp.float32) + b1_ref[...]
    s = _sigmoid_fast(z)
    x11 = x * s

    # Lane reductions on the (otherwise idle) MXU instead of VALU/XLU.
    ones = jnp.ones((x.shape[-1], 1), jnp.float32)

    def rsum(q):
        return jnp.dot(q, ones, preferred_element_type=jnp.float32)  # (C, 1)

    c = x.shape[0]
    partial = jnp.concatenate(
        [rsum(x), rsum(x11), rsum(x11 * x11), rsum(x11 * x), rsum(x * x),
         jnp.zeros((c, 3), jnp.float32)], axis=-1)                    # (C, 8)

    @pl.when(t == 0)
    def _():
        acc_ref[...] = jnp.zeros_like(acc_ref)

    acc_ref[...] += partial[None, None]


def _out_kernel(x_ref, w1_ref, b1_ref, scale_ref, shift_ref, gsc_ref, o_ref,
                *, mm_dtype):
    # Folded affine:  out = max(x * (scale * sigmoid(w1 x + b1) + gate*scale)
    #                            + shift, 0)
    x = x_ref[0]                                                     # (C, ts)
    z = jnp.dot(w1_ref[...], x.astype(mm_dtype),
                preferred_element_type=jnp.float32) + b1_ref[...]
    s = _sigmoid_fast(z)
    coef = scale_ref[...] * s + gsc_ref[0]                           # (C, ts)
    o_ref[0] = jnp.maximum(x * coef + shift_ref[...], 0.0)


# ----------------------------- wrapper -----------------------------------------


def aggregation_module_group(x, params):
    """x: (N, C, H, W) float32.  params: dict of w1,b1,w4,b4,gamma,beta."""
    N, C, H, W = x.shape
    HW = H * W
    vmem_limit, block_budget = _hw_budgets()

    # NCHW -> (N, C, HW) is a free reshape.  Pad the lane dim to a multiple of
    # 128 so blocks stay lane-dense; padded zeros contribute nothing to the
    # statistics since every accumulated quantity carries a factor of x.
    HWp = _round_up(HW, 128)
    x3 = x.reshape(N, C, HW).astype(jnp.float32)
    if HWp != HW:
        x3 = jnp.pad(x3, ((0, 0), (0, 0), (0, HWp - HW)))

    ts = _pick_tile(HWp, C, block_budget)
    nT = HWp // ts

    # Parallel spatial super-chunks so the 2nd TensorCore (v7x) gets pass-1
    # work even when N is small; harmless (same total steps) elsewhere.
    P = 2 if (nT >= 2 and nT % 2 == 0) else 1
    nTp = nT // P

    # bf16 matmul operands only pay off (and only matter) at large C.
    mm_dtype = jnp.bfloat16 if C >= 128 else jnp.float32
    w1 = params["w1"].astype(mm_dtype)                               # (C, C)
    b1 = params["b1"].reshape(C, 1).astype(jnp.float32)

    # --- pass 1: per-sample partial sums for GAP gate + BN statistics --------
    stats = pl.pallas_call(
        functools.partial(_stats_kernel, mm_dtype=mm_dtype),
        out_shape=jax.ShapeDtypeStruct((N, P, C, 8), jnp.float32),
        grid=(N, P, nTp),
        in_specs=[
            pl.BlockSpec((1, C, ts), lambda n, p, t: (n, 0, p * nTp + t)),
            pl.BlockSpec((C, C), lambda n, p, t: (0, 0)),
            pl.BlockSpec((C, 1), lambda n, p, t: (0, 0)),
        ],
        out_specs=pl.BlockSpec((1, 1, C, 8), lambda n, p, t: (n, p, 0, 0)),
        compiler_params=pltpu.CompilerParams(
            dimension_semantics=("parallel", "parallel", "arbitrary"),
            vmem_limit_bytes=vmem_limit),
    )(x3, w1, b1)

    stats = stats.sum(axis=1)                                        # (N, C, 8)
    sx = stats[..., 0]
    s11 = stats[..., 1]
    s11sq = stats[..., 2]
    s11x = stats[..., 3]
    sxsq = stats[..., 4]

    # --- tiny glue (plain JAX on (N, C) vectors): gate + BN finalize ---------
    pooled = sx / jnp.float32(HW)                                    # GAP(x)
    gate = jax.nn.sigmoid(pooled @ params["w4"].T.astype(jnp.float32)
                          + params["b4"].astype(jnp.float32))        # (N, C)

    # y = x11 + gate*x  ->  sums of y, y^2 from the accumulated moments.
    sum_y = s11 + gate * sx
    sum_y2 = s11sq + 2.0 * gate * s11x + gate * gate * sxsq
    # TODO(synk): E[y^2]-E[y]^2 in f32 can cancel for very large N*HW or large
    # activations; switch to mean-shifted (Welford-style) accumulation then.
    count = jnp.float32(N * HW)
    mean = jnp.sum(sum_y, axis=0) / count                            # (C,)
    var = jnp.sum(sum_y2, axis=0) / count - mean * mean              # biased
    inv_std = 1.0 / jnp.sqrt(var + BN_EPS)
    scale = params["gamma"].astype(jnp.float32) * inv_std            # (C,)
    shift = params["beta"].astype(jnp.float32) - mean * scale        # (C,)
    gscale = (gate * scale[None, :]).reshape(N, C, 1)                # (N, C, 1)

    # --- pass 2: recompute x11, fused gate + BN affine + ReLU, write out -----
    out = pl.pallas_call(
        functools.partial(_out_kernel, mm_dtype=mm_dtype),
        out_shape=jax.ShapeDtypeStruct((N, C, HWp), jnp.float32),
        grid=(N, nT),
        in_specs=[
            pl.BlockSpec((1, C, ts), lambda n, t: (n, 0, t)),
            pl.BlockSpec((C, C), lambda n, t: (0, 0)),
            pl.BlockSpec((C, 1), lambda n, t: (0, 0)),
            pl.BlockSpec((C, 1), lambda n, t: (0, 0)),
            pl.BlockSpec((C, 1), lambda n, t: (0, 0)),
            pl.BlockSpec((1, C, 1), lambda n, t: (n, 0, 0)),
        ],
        out_specs=pl.BlockSpec((1, C, ts), lambda n, t: (n, 0, t)),
        compiler_params=pltpu.CompilerParams(
            dimension_semantics=("parallel", "parallel"),
            vmem_limit_bytes=vmem_limit),
    )(x3, w1, b1, scale.reshape(C, 1), shift.reshape(C, 1), gscale)

    if HWp != HW:
        out = out[..., :HW]
    return out.reshape(N, C, H, W)


# ----------------------------- reference (plain JAX) ---------------------------


def reference(x, p):
    x = x.astype(jnp.float32)
    x1 = jnp.einsum("nchw,oc->nohw", x, p["w1"]) + p["b1"][None, :, None, None]
    x11 = x * jax.nn.sigmoid(x1)
    x4 = jax.nn.sigmoid(x.mean(axis=(2, 3)) @ p["w4"].T + p["b4"])   # (N, C)
    x44 = x * x4[:, :, None, None]
    yy = x11 + x44
    mean = yy.mean(axis=(0, 2, 3))
    var = yy.var(axis=(0, 2, 3))                                     # biased
    yn = (yy - mean[None, :, None, None]) / jnp.sqrt(
        var[None, :, None, None] + BN_EPS)
    yn = yn * p["gamma"][None, :, None, None] + p["beta"][None, :, None, None]
    return jnp.maximum(yn, 0.0)


# ----------------------------- main ---------------------------------------------

if __name__ == "__main__":
    N, C, H, W = 2, 8, 16, 16          # int_channel == out_channel == 8
    key = jax.random.PRNGKey(0)
    kx, k1, k2, k3, k4 = jax.random.split(key, 5)

    x = jax.random.normal(kx, (N, C, H, W), dtype=jnp.float32)
    params = {
        "w1": 0.2 * jax.random.normal(k1, (C, C), dtype=jnp.float32),  # conv_l1 (1x1)
        "b1": 0.1 * jax.random.normal(k2, (C,), dtype=jnp.float32),
        "w4": 0.2 * jax.random.normal(k3, (C, C), dtype=jnp.float32),  # conv_l4 Linear
        "b4": 0.1 * jax.random.normal(k4, (C,), dtype=jnp.float32),
        "gamma": jnp.ones((C,), dtype=jnp.float32),                    # BN defaults
        "beta": jnp.zeros((C,), dtype=jnp.float32),
    }

    out = jax.block_until_ready(aggregation_module_group(x, params))
    ref = jax.block_until_ready(reference(x, params))

    assert out.shape == (N, C, H, W)
    # 2e-3 tolerance: the in-kernel sigmoid uses the approx EUP reciprocal
    # (~2^-12 rel err), which after BN normalization stays well below 2e-3.
    assert jnp.allclose(out, ref, rtol=2e-3, atol=2e-3), (
        float(jnp.max(jnp.abs(out - ref))))
    print("KERNEL_OK")
</pallas_src>

<mosaic_0001>
module attributes {stable_mosaic.version = 11 : i64} {
  func.func @_stats_kernel(%arg0: i32, %arg1: i32, %arg2: i32, %arg3: memref<1x8x256xf32, #tpu.memory_space<vmem>>, %arg4: memref<8x8xf32, #tpu.memory_space<vmem>>, %arg5: memref<8x1xf32, #tpu.memory_space<vmem>>, %arg6: memref<1x1x8x8xf32, #tpu.memory_space<vmem>>) attributes {dimension_semantics = [#tpu.dimension_semantics<parallel>, #tpu.dimension_semantics<parallel>, #tpu.dimension_semantics<arbitrary>], iteration_bounds = array<i64: 2, 1, 1>, scalar_prefetch = 0 : i64, scratch_operands = 0 : i64, tpu.core_type = #tpu.core_type<tc>, window_params = [{transform_indices = @transform_0, window_bounds = array<i64: 1, 8, 256>}, {pipeline_mode = #tpu.pipeline_mode<synchronous>, transform_indices = @transform_1, window_bounds = array<i64: 8, 8>}, {pipeline_mode = #tpu.pipeline_mode<synchronous>, transform_indices = @transform_2, window_bounds = array<i64: 8, 1>}, {transform_indices = @transform_3, window_bounds = array<i64: 1, 1, 8, 8>}]} {
    %c0 = arith.constant 0 : index
    %c0_0 = arith.constant 0 : index
    %c0_1 = arith.constant 0 : index
    %0 = vector.load %arg3[%c0, %c0_0, %c0_1] : memref<1x8x256xf32, #tpu.memory_space<vmem>>, vector<1x8x256xf32>
    %1 = vector.shape_cast %0 : vector<1x8x256xf32> to vector<8x256xf32>
    %c0_2 = arith.constant 0 : index
    %c0_3 = arith.constant 0 : index
    %2 = vector.load %arg4[%c0_2, %c0_3] : memref<8x8xf32, #tpu.memory_space<vmem>>, vector<8x8xf32>
    %cst = arith.constant dense<0.000000e+00> : vector<8x256xf32>
    %3 = tpu.matmul %2, %1, %cst {dimension_numbers = #tpu.dot_dimension_numbers<[1], [0], [0], [1], [0, 0, 1, 1], [], []>} : vector<8x8xf32>, vector<8x256xf32>, vector<8x256xf32> -> vector<8x256xf32>
    %c0_4 = arith.constant 0 : index
    %c0_5 = arith.constant 0 : index
    %4 = vector.load %arg5[%c0_4, %c0_5] : memref<8x1xf32, #tpu.memory_space<vmem>>, vector<8x1xf32>
    %5 = vector.broadcast %4 : vector<8x1xf32> to vector<8x256xf32>
    %6 = arith.addf %3, %5 : vector<8x256xf32>
    %cst_6 = arith.constant 0.000000e+00 : f32
    %7 = vector.broadcast %cst_6 : f32 to vector<8x256xf32>
    %8 = arith.subf %7, %6 : vector<8x256xf32>
    %9 = math.exp %8 : vector<8x256xf32>
    %cst_7 = arith.constant 1.000000e+00 : f32
    %10 = vector.broadcast %cst_7 : f32 to vector<8x256xf32>
    %11 = arith.addf %10, %9 : vector<8x256xf32>
    %12 = tpu.reciprocal %11 {approx = true} : vector<8x256xf32> -> vector<8x256xf32>
    %13 = arith.mulf %1, %12 : vector<8x256xf32>
    %cst_8 = arith.constant 1.000000e+00 : f32
    %14 = vector.broadcast %cst_8 : f32 to vector<256x1xf32>
    %cst_9 = arith.constant dense<0.000000e+00> : vector<8x1xf32>
    %15 = tpu.matmul %1, %14, %cst_9 {dimension_numbers = #tpu.dot_dimension_numbers<[1], [0], [0], [1], [0, 0, 1, 1], [], []>} : vector<8x256xf32>, vector<256x1xf32>, vector<8x1xf32> -> vector<8x1xf32>
    %cst_10 = arith.constant dense<0.000000e+00> : vector<8x1xf32>
    %16 = tpu.matmul %13, %14, %cst_10 {dimension_numbers = #tpu.dot_dimension_numbers<[1], [0], [0], [1], [0, 0, 1, 1], [], []>} : vector<8x256xf32>, vector<256x1xf32>, vector<8x1xf32> -> vector<8x1xf32>
    %17 = arith.mulf %13, %13 : vector<8x256xf32>
    %cst_11 = arith.constant dense<0.000000e+00> : vector<8x1xf32>
    %18 = tpu.matmul %17, %14, %cst_11 {dimension_numbers = #tpu.dot_dimension_numbers<[1], [0], [0], [1], [0, 0, 1, 1], [], []>} : vector<8x256xf32>, vector<256x1xf32>, vector<8x1xf32> -> vector<8x1xf32>
    %19 = arith.mulf %13, %1 : vector<8x256xf32>
    %cst_12 = arith.constant dense<0.000000e+00> : vector<8x1xf32>
    %20 = tpu.matmul %19, %14, %cst_12 {dimension_numbers = #tpu.dot_dimension_numbers<[1], [0], [0], [1], [0, 0, 1, 1], [], []>} : vector<8x256xf32>, vector<256x1xf32>, vector<8x1xf32> -> vector<8x1xf32>
    %21 = arith.mulf %1, %1 : vector<8x256xf32>
    %cst_13 = arith.constant dense<0.000000e+00> : vector<8x1xf32>
    %22 = tpu.matmul %21, %14, %cst_13 {dimension_numbers = #tpu.dot_dimension_numbers<[1], [0], [0], [1], [0, 0, 1, 1], [], []>} : vector<8x256xf32>, vector<256x1xf32>, vector<8x1xf32> -> vector<8x1xf32>
    %cst_14 = arith.constant 0.000000e+00 : f32
    %23 = vector.broadcast %cst_14 : f32 to vector<8x3xf32>
    %24 = tpu.concatenate %15, %16, %18, %20, %22, %23 in 1 : vector<8x1xf32>, vector<8x1xf32>, vector<8x1xf32>, vector<8x1xf32>, vector<8x1xf32>, vector<8x3xf32> -> vector<8x8xf32>
    %c0_i32 = arith.constant 0 : i32
    %25 = arith.cmpi eq, %arg2, %c0_i32 : i32
    %26 = arith.extui %25 : i1 to i32
    %c0_i32_15 = arith.constant 0 : i32
    %27 = arith.cmpi ne, %26, %c0_i32_15 : i32
    scf.if %27 {
      %cst_24 = arith.constant 0.000000e+00 : f32
      %32 = vector.broadcast %cst_24 : f32 to vector<1x1x8x8xf32>
      %c0_25 = arith.constant 0 : index
      %c0_26 = arith.constant 0 : index
      %c0_27 = arith.constant 0 : index
      %c0_28 = arith.constant 0 : index
      %33 = vector.load %arg6[%c0_25, %c0_26, %c0_27, %c0_28] : memref<1x1x8x8xf32, #tpu.memory_space<vmem>>, vector<1x1x8x8xf32>
      tpu.vector_store %arg6[%c0_25, %c0_26, %c0_27, %c0_28], %32 {strides = array<i32>} : memref<1x1x8x8xf32, #tpu.memory_space<vmem>>, vector<1x1x8x8xf32>,
    } else {
    }
    %c0_16 = arith.constant 0 : index
    %c0_17 = arith.constant 0 : index
    %c0_18 = arith.constant 0 : index
    %c0_19 = arith.constant 0 : index
    %28 = vector.load %arg6[%c0_16, %c0_17, %c0_18, %c0_19] : memref<1x1x8x8xf32, #tpu.memory_space<vmem>>, vector<1x1x8x8xf32>
    %29 = vector.shape_cast %24 : vector<8x8xf32> to vector<1x1x8x8xf32>
    %30 = arith.addf %28, %29 : vector<1x1x8x8xf32>
    %c0_20 = arith.constant 0 : index
    %c0_21 = arith.constant 0 : index
    %c0_22 = arith.constant 0 : index
    %c0_23 = arith.constant 0 : index
    %31 = vector.load %arg6[%c0_20, %c0_21, %c0_22, %c0_23] : memref<1x1x8x8xf32, #tpu.memory_space<vmem>>, vector<1x1x8x8xf32>
    tpu.vector_store %arg6[%c0_20, %c0_21, %c0_22, %c0_23], %30 {strides = array<i32>} : memref<1x1x8x8xf32, #tpu.memory_space<vmem>>, vector<1x1x8x8xf32>,
    return
  }
  func.func @transform_0(%arg0: i32, %arg1: i32, %arg2: i32) -> (i32, i32, i32) {
    %c1_i32 = arith.constant 1 : i32
    %0 = arith.muli %arg1, %c1_i32 : i32
    %1 = arith.addi %0, %arg2 : i32
    %c0_i32 = arith.constant 0 : i32
    %c0_i32_0 = arith.constant 0 : i32
    return %arg0, %c0_i32, %1 : i32, i32, i32
  }
  func.func @transform_1(%arg0: i32, %arg1: i32, %arg2: i32) -> (i32, i32) {
    %c0_i32 = arith.constant 0 : i32
    %c0_i32_0 = arith.constant 0 : i32
    %c0_i32_1 = arith.constant 0 : i32
    return %c0_i32, %c0_i32_0 : i32, i32
  }
  func.func @transform_2(%arg0: i32, %arg1: i32, %arg2: i32) -> (i32, i32) {
    %c0_i32 = arith.constant 0 : i32
    %c0_i32_0 = arith.constant 0 : i32
    %c0_i32_1 = arith.constant 0 : i32
    return %c0_i32, %c0_i32_0 : i32, i32
  }
  func.func @transform_3(%arg0: i32, %arg1: i32, %arg2: i32) -> (i32, i32, i32, i32) {
    %c0_i32 = arith.constant 0 : i32
    %c0_i32_0 = arith.constant 0 : i32
    %c0_i32_1 = arith.constant 0 : i32
    return %arg0, %arg1, %c0_i32, %c0_i32_0 : i32, i32, i32, i32
  }
}

</mosaic_0001>

<llo_original>
// kernel: tpu_custom_call.1
$region0: #{tpu_custom_call.1}
  #allocation0 [shape = 'u32[]', space=smem, size = 0x4, offset = 0x4, fixed_abs, tag = 'smem constant byte address 0x4 - core index']
  #allocation1 [shape = 'u32[144,128]{1,0:T(1,128)}', space=vmem, size = 0x12000, scoped, tag = 'internal scratch']
  %s0 = inlined_call_operand.hbm [shape: f32[2,8,256], index: 0, kind: input, shape index: {}]
  %s1 = inlined_call_operand.vmem [shape: f32[8,8], index: 1, kind: input, shape index: {}]
  %s2 = inlined_call_operand.vmem [shape: f32[8,1], index: 2, kind: input, shape index: {}]
  %s3 = inlined_call_operand.hbm [shape: f32[2,1,8,8], index: 3, kind: output, shape index: {}]
  %s4 = sld [smem:[#allocation0]]
  $region53: #{tpu_custom_call.1} parent=0
    _
  %s6 = ssub.s32 1, %s4
  %s7 = scalar_select 0, %s6, %s4
  $region1: #{tpu_custom_call.1} parent=0
    #allocation2 [shape = 'u8[16384]{0}', space=vmem, size = 0x4000, scoped, tag = 'input window, operand 0']
    #allocation3 [shape = 's32[2]{0}', space=sflag, size = 0x8, scoped, tag = 'scoped memory for tpu_custom_call.1']
    #allocation4 [shape = 's32[2]{0}', space=sflag, size = 0x8, scoped, tag = 'scoped memory for tpu_custom_call.1']
    #allocation5 [shape = 'u8[8192]{0}', space=vmem, size = 0x2000, scoped, tag = 'output window, operand 0']
    %8 = vsyncpa [#allocation3], 0
    %s9 = scalar_lea.sflag [#allocation3], 1
    %10 = vsyncpa %s9, 0
    %11 = vsyncpa [#allocation4], 0
    %s12 = scalar_lea.sflag [#allocation4], 1
    %13 = vsyncpa %s12, 0
    loop: start=0, step=1, limit=4
    $region2: #{tpu_custom_call.1} parent=1 // loop_pre_header
      _
    $region3: #{tpu_custom_call.1} parent=1 // loop_header
      %s15 = sphi 0, %s19
      %p16 = scmp.ge.s32.totalorder %s15, 4
      %s22 = sphi 0, %s41
      %s23 = sphi 0, %s37
      %s24 = sphi 0, %s33
      %s25 = sphi 0, %s22
      %s26 = sphi 0, %s23
      %s27 = sphi 0, %s24
      %s28 = sphi 0, %s25
      %s29 = sphi 0, %s26
      %s30 = sphi 0, %s27
      %s48 = sphi 0, %s50
      %s51 = sphi 0, %s48
      %s52 = sphi 0, %s51
      %s68 = sphi 0, %s52
      %s72 = sphi 0, %s72
      %s74 = sphi 0, %s72
      %s75 = sphi 0, %s74
      %s89 = sphi 0, %s75
      %s93 = sphi 0, %s93
      %s95 = sphi 0, %s93
      %s96 = sphi 0, %s95
      %s110 = sphi 0, %s96
      %s118 = sphi 0, %s120
      %s121 = sphi 0, %s118
      %s122 = sphi 0, %s121
      %s138 = sphi 0, %s122
    $region4: #{tpu_custom_call.1} parent=1 // loop_header_branch
      %18 = sbr.rel (%p16) target = $region8
    $region5: #{tpu_custom_call.1} parent=1 // loop_body
      %s20 = ssub.s32 %s15, 1
      %s21 = ssub.s32 %s15, 2
      %s31 = sadd.s32 1, %s24
      %p32 = scmp.ge.s32.totalorder %s31, 1
      %s33 = scalar_select %p32, 0, %s31
      %s34 = sadd.s32 1, %s23
      %s35 = scalar_select %p32, %s34, %s23
      %p36 = scmp.ge.s32.totalorder %s35, 1
      %s37 = scalar_select %p36, 0, %s35
      %s38 = sadd.s32 1, %s22
      %s39 = scalar_select %p36, %s38, %s22
      %p40 = scmp.ge.s32.totalorder %s39, 2
      %s41 = scalar_select %p40, 0, %s39
      %s42 = sadd.s32 %s23, %s24
      %s43 = sadd.s32 %s37, %s33
      %s44 = ssub.s32 %s22, %s41
      %s45 = ssub.s32 %s42, %s43
      %s46 = sor.u32 %s44, %s45
      %p47 = scmp.eq.s32.totalorder %s46, 0
      %s49 = sadd.s32 %s48, 1
      %s50 = scalar_select %p47, %s48, %s49
      %p53 = pneg %p47
      %p54 = scmp.eq.s32.totalorder %s15, 1
      %p55 = por %p53, %p54
      %p56 = scmp.ne.s32.totalorder %s48, %s51
      %p57 = scmp.eq.s32.totalorder %s15, 0
      %p58 = por %p56, %p57
      %p59 = scmp.ne.s32.totalorder %s48, %s51
      %p60 = scmp.eq.s32.totalorder %s20, 1
      %p61 = por %p59, %p60
      %p62 = scmp.ne.s32.totalorder %s51, %s52
      %p63 = scmp.eq.s32.totalorder %s20, 0
      %p64 = por %p62, %p63
      %p65 = scmp.ne.s32.totalorder %s51, %s52
      %p66 = scmp.eq.s32.totalorder %s21, 1
      %p67 = por %p65, %p66
      %p69 = scmp.ne.s32.totalorder %s52, %s68
      %p70 = scmp.eq.s32.totalorder %s21, 0
      %p71 = por %p69, %p70
      %s73 = sadd.s32 %s72, 1
      %p76 = scmp.eq.s32.totalorder %s15, 1
      %p77 = scmp.ne.s32.totalorder %s72, %s74
      %p78 = scmp.eq.s32.totalorder %s15, 0
      %p79 = por %p77, %p78
      %p80 = scmp.ne.s32.totalorder %s72, %s74
      %p81 = scmp.eq.s32.totalorder %s20, 1
      %p82 = por %p80, %p81
      %p83 = scmp.ne.s32.totalorder %s74, %s75
      %p84 = scmp.eq.s32.totalorder %s20, 0
      %p85 = por %p83, %p84
      %p86 = scmp.ne.s32.totalorder %s74, %s75
      %p87 = scmp.eq.s32.totalorder %s21, 1
      %p88 = por %p86, %p87
      %p90 = scmp.ne.s32.totalorder %s75, %s89
      %p91 = scmp.eq.s32.totalorder %s21, 0
      %p92 = por %p90, %p91
      %s94 = sadd.s32 %s93, 1
      %p97 = scmp.eq.s32.totalorder %s15, 1
      %p98 = scmp.ne.s32.totalorder %s93, %s95
      %p99 = scmp.eq.s32.totalorder %s15, 0
      %p100 = por %p98, %p99
      %p101 = scmp.ne.s32.totalorder %s93, %s95
      %p102 = scmp.eq.s32.totalorder %s20, 1
      %p103 = por %p101, %p102
      %p104 = scmp.ne.s32.totalorder %s95, %s96
      %p105 = scmp.eq.s32.totalorder %s20, 0
      %p106 = por %p104, %p105
      %p107 = scmp.ne.s32.totalorder %s95, %s96
      %p108 = scmp.eq.s32.totalorder %s21, 1
      %p109 = por %p107, %p108
      %p111 = scmp.ne.s32.totalorder %s96, %s110
      %p112 = scmp.eq.s32.totalorder %s21, 0
      %p113 = por %p111, %p112
      %s114 = ssub.s32 %s22, %s41
      %s115 = ssub.s32 %s23, %s37
      %s116 = sor.u32 %s114, %s115
      %p117 = scmp.eq.s32.totalorder %s116, 0
      %s119 = sadd.s32 %s118, 1
      %s120 = scalar_select %p117, %s118, %s119
      %p123 = pneg %p117
      %p124 = scmp.eq.s32.totalorder %s15, 1
      %p125 = por %p123, %p124
      %p126 = scmp.ne.s32.totalorder %s118, %s121
      %p127 = scmp.eq.s32.totalorder %s15, 0
      %p128 = por %p126, %p127
      %p129 = scmp.ne.s32.totalorder %s118, %s121
      %p130 = scmp.eq.s32.totalorder %s20, 1
      %p131 = por %p129, %p130
      %p132 = scmp.ne.s32.totalorder %s121, %s122
      %p133 = scmp.eq.s32.totalorder %s20, 0
      %p134 = por %p132, %p133
      %p135 = scmp.ne.s32.totalorder %s121, %s122
      %p136 = scmp.eq.s32.totalorder %s21, 1
      %p137 = por %p135, %p136
      %p139 = scmp.ne.s32.totalorder %s122, %s138
      %p140 = scmp.eq.s32.totalorder %s21, 0
      %p141 = por %p139, %p140
      %p142 = scmp.le.s32.totalorder 1, %s15
      %p143 = scmp.lt.s32.totalorder %s15, 3
      %p144 = pnand %p142, %p143
      %p145 = pneg %p144
      // Predicated region
      $region9: #{tpu_custom_call.1} parent=5 // pred_check
        _
      $region10: #{tpu_custom_call.1} parent=5 // pred_check_branch
        %147 = sbr.rel (%p144) target = $region12
      $region11: #{tpu_custom_call.1} parent=5 // pred_region
        %s148 = ssub.s32 %s15, 1
        // Predicated region
        $region13: #{tpu_custom_call.1} parent=11 // pred_check
          %p149 = pneg %p85
        $region14: #{tpu_custom_call.1} parent=11 // pred_check_branch
          %151 = sbr.rel (%p149) target = $region16
        $region15: #{tpu_custom_call.1} parent=11 // pred_region
          _
        $region16: #{tpu_custom_call.1} parent=11 // pred_fallthru
          _
        // Predicated region
        $region17: #{tpu_custom_call.1} parent=11 // pred_check
          %p152 = pneg %p106
        $region18: #{tpu_custom_call.1} parent=11 // pred_check_branch
          %154 = sbr.rel (%p152) target = $region20
        $region19: #{tpu_custom_call.1} parent=11 // pred_region
          _
        $region20: #{tpu_custom_call.1} parent=11 // pred_fallthru
          _
      $region12: #{tpu_custom_call.1} parent=5 // pred_fallthru
        _
      %p155 = scmp.lt.s32.totalorder %s15, 2
      // Predicated region
      $region21: #{tpu_custom_call.1} parent=5 // pred_check
        %p156 = pneg %p155
      $region22: #{tpu_custom_call.1} parent=5 // pred_check_branch
        %158 = sbr.rel (%p156) target = $region24
      $region23: #{tpu_custom_call.1} parent=5 // pred_region
        // Predicated region
        $region25: #{tpu_custom_call.1} parent=23 // pred_check
          %p159 = pneg %p58
        $region26: #{tpu_custom_call.1} parent=23 // pred_check_branch
          %161 = sbr.rel (%p159) target = $region28
        $region27: #{tpu_custom_call.1} parent=23 // pred_region
          %s162 = sand.u32 %s48, 1
          %s163 = scalar_lea.sflag [#allocation3], %s162
          %s164 = sand.u32 %s48, 1
          %s165 = smul.addr %s164, 16
          %s166 = scalar_lea.vmem [#allocation2], %s165
          %s167 = sadd.s32 %s23, %s24
          %s168 = smul.u32 2, %s167
          %s170 = ssub.s32 256, 256
          %171 = vsyncadd %s163, %s170
          %s172 = smul.addr %s22, 2
          %s173 = sadd.s32 %s168, %s172
          %s174 = smul.addr %s173, 128
          %s175 = scalar_lea.hbm %s0, %s174
          %s177 = sshll.u32 %s166, 4
          %s178 = int_to_ptr.vmem [resolvable:$true] %s177
          %180 = dma.hbm_to_vmem [thread:$0]  %s175, 256, %s178, %s163
        $region28: #{tpu_custom_call.1} parent=23 // pred_fallthru
          _
      $region24: #{tpu_custom_call.1} parent=5 // pred_fallthru
        _
      %p181 = scmp.le.s32.totalorder 1, %s15
      %p182 = scmp.lt.s32.totalorder %s15, 3
      %p183 = pnand %p181, %p182
      %p184 = pneg %p183
      // Predicated region
      $region29: #{tpu_custom_call.1} parent=5 // pred_check
        _
      $region30: #{tpu_custom_call.1} parent=5 // pred_check_branch
        %186 = sbr.rel (%p183) target = $region32
      $region31: #{tpu_custom_call.1} parent=5 // pred_region
        %s187 = ssub.s32 %s15, 1
        %s188 = sand.u32 %s51, 1
        %s189 = scalar_lea.sflag [#allocation3], %s188
        %s190 = sand.u32 %s51, 1
        %s191 = smul.addr %s190, 16
        %s192 = scalar_lea.vmem [#allocation2], %s191
        // Predicated region
        $region33: #{tpu_custom_call.1} parent=31 // pred_check
          %p193 = pneg %p64
        $region34: #{tpu_custom_call.1} parent=31 // pred_check_branch
          %195 = sbr.rel (%p193) target = $region36
        $region35: #{tpu_custom_call.1} parent=31 // pred_region
          %196 = dma.done %s189, 256
        $region36: #{tpu_custom_call.1} parent=31 // pred_fallthru
          _
        %s197 = sand.u32 %s51, 1
        %s198 = scalar_lea.sflag [#allocation3], %s197
        %s199 = sand.u32 %s51, 1
        %s200 = smul.addr %s199, 16
        %s201 = scalar_lea.vmem [#allocation2], %s200
        %p202 = pneg %p64
        %p203 = pneg %p61
        %p204 = pneg %p85
        %p205 = pneg %p82
        %p206 = pneg %p106
        %p207 = pneg %p103
        %p208 = pneg %p134
        %p209 = pneg %p131
        %s210 = sand.u32 %s121, 1
        %s211 = scalar_lea.sflag [#allocation4], %s210
        %s212 = sand.u32 %s121, 1
        %s213 = smul.addr %s212, 8
        %s214 = scalar_lea.vmem [#allocation5], %s213
        %s215 = sadd.s32 %s26, %s27
        %s216 = smul.u32 2, %s215
        %v217 = vld [vmem:[%s192] sm:$0xff]
        %v218 = vld [vmem:[%s192 + $0x8] sm:$0xff]
        %v219 = vld [vmem:[%s1] sm:$0xff]
        %v220 = vld [vmem:[%s2] sm:$0xff]
        %222 = vset.pattern.permute.xlu0 0
        %223 = vperm.xlu0 %222, %v220
        %v224 = vpop.permute.xlu0 %223
        %vm226 = vcmask 64512
        %v228 = vsel %vm226, %v219, 0
        %230 = vmatprep.subr.mxu0 %v218
        %231 = vmatpush1.msra.mxu0 %v217
        %232 = vmatprep.subr.mxu0 0.0
        %233 = vmatpush1.msra.mxu0 0.0
        %234 = vmatprep.subr.mxu0 0.0
        %235 = vmatpush1.msra.mxu0 0.0
        %236 = vmatprep.subr.mxu0 0.0
        %237 = vmatpush1.msra.mxu0 0.0
        %238 = vmatprep.subr.mxu0 0.0
        %239 = vmatpush1.msra.mxu0 0.0
        %240 = vmatprep.subr.mxu0 0.0
        %241 = vmatpush1.msra.mxu0 0.0
        %242 = vmatprep.subr.mxu0 0.0
        %243 = vmatpush1.msra.mxu0 0.0
        %244 = vmatprep.subr.mxu0 0.0
        %245 = vmatpush1.msra.mxu0 0.0
        %246 = vmatprep.subr.mxu0 0.0
        %247 = vmatpush1.msra.mxu0 0.0
        %248 = vmatprep.subr.mxu0 0.0
        %249 = vmatpush1.msra.mxu0 0.0
        %250 = vmatprep.subr.mxu0 0.0
        %251 = vmatpush1.msra.mxu0 0.0
        %252 = vmatprep.subr.mxu0 0.0
        %253 = vmatpush1.msra.mxu0 0.0
        %254 = vmatprep.subr.mxu0 0.0
        %255 = vmatpush1.msra.mxu0 0.0
        %256 = vmatprep.subr.mxu0 0.0
        %257 = vmatpush1.msra.mxu0 0.0
        %258 = vmatprep.subr.mxu0 0.0
        %259 = vmatpush1.msra.mxu0 0.0
        %260 = vmatprep.subr.mxu0 0.0
        %261 = vmatpush1.msra.mxu0 0.0
        %262 = vmatprep.subr.mxu0 0.0
        %263 = vmatpush1.msra.mxu0 0.0
        %264 = vmatprep.subr.mxu0 0.0
        %265 = vmatpush1.msra.mxu0 0.0
        %266 = vmatprep.subr.mxu0 0.0
        %267 = vmatpush1.msra.mxu0 0.0
        %268 = vmatprep.subr.mxu0 0.0
        %269 = vmatpush1.msra.mxu0 0.0
        %270 = vmatprep.subr.mxu0 0.0
        %271 = vmatpush1.msra.mxu0 0.0
        %272 = vmatprep.subr.mxu0 0.0
        %273 = vmatpush1.msra.mxu0 0.0
        %274 = vmatprep.subr.mxu0 0.0
        %275 = vmatpush1.msra.mxu0 0.0
        %276 = vmatprep.subr.mxu0 0.0
        %277 = vmatpush1.msra.mxu0 0.0
        %278 = vmatprep.subr.mxu0 0.0
        %279 = vmatpush1.msra.mxu0 0.0
        %280 = vmatprep.subr.mxu0 0.0
        %281 = vmatpush1.msra.mxu0 0.0
        %282 = vmatprep.subr.mxu0 0.0
        %283 = vmatpush1.msra.mxu0 0.0
        %284 = vmatprep.subr.mxu0 0.0
        %285 = vmatpush1.msra.mxu0 0.0
        %286 = vmatprep.subr.mxu0 0.0
        %287 = vmatpush1.msra.mxu0 0.0
        %288 = vmatprep.subr.mxu0 0.0
        %289 = vmatpush1.msra.mxu0 0.0
        %290 = vmatprep.subr.mxu0 0.0
        %291 = vmatpush1.msra.mxu0 0.0
        %292 = vmatprep.subr.mxu0 0.0
        %293 = vmatpush1.msra.mxu0 0.0
        %294 = vmatprep.mubr.f32.mxu0 0.0
        %295 = vmatmul.mubr.f32.gmra.mrb[0].mxu0 %v228
        %v296 = vpop.f32.mrb[0].mxu0
        %v297 = vadd.f32 %v224, %v296
        %v298 = vpop.f32.mrb[0].mxu0
        %v299 = vadd.f32 %v224, %v298
        %300 = vdwg.mxu0
        %v301 = vsub.f32 0.0, %v297
        %v302 = vsub.f32 0.0, %v299
        %v303 = vmul.f32 %v301, 1.442695
        %v304 = vpow.pop %v303
        %v305 = vmul.f32 %v302, 1.442695
        %v306 = vpow.pop %v305
        %v307 = vadd.f32 %v304, 1.0
        %v308 = vadd.f32 %v306, 1.0
        %v309 = vrcp.pop %v307
        %v310 = vrcp.pop %v308
        %v311 = vmul.f32 %v217, %v309
        %v312 = vmul.f32 %v218, %v310
        %313 = vmatprep.subr.mxu0 0.0
        %314 = vmatpush1.msra.mxu0 1.0
        %315 = vmatprep.subr.mxu0 0.0
        %316 = vmatpush1.msra.mxu0 1.0
        %317 = vmatprep.subr.mxu0 0.0
        %318 = vmatpush1.msra.mxu0 1.0
        %319 = vmatprep.subr.mxu0 0.0
        %320 = vmatpush1.msra.mxu0 1.0
        %321 = vmatprep.subr.mxu0 0.0
        %322 = vmatpush1.msra.mxu0 1.0
        %323 = vmatprep.subr.mxu0 0.0
        %324 = vmatpush1.msra.mxu0 1.0
        %325 = vmatprep.subr.mxu0 0.0
        %326 = vmatpush1.msra.mxu0 1.0
        %327 = vmatprep.subr.mxu0 0.0
        %328 = vmatpush1.msra.mxu0 1.0
        %329 = vmatprep.subr.mxu0 0.0
        %330 = vmatpush1.msra.mxu0 1.0
        %331 = vmatprep.subr.mxu0 0.0
        %332 = vmatpush1.msra.mxu0 1.0
        %333 = vmatprep.subr.mxu0 0.0
        %334 = vmatpush1.msra.mxu0 1.0
        %335 = vmatprep.subr.mxu0 0.0
        %336 = vmatpush1.msra.mxu0 1.0
        %337 = vmatprep.subr.mxu0 0.0
        %338 = vmatpush1.msra.mxu0 1.0
        %339 = vmatprep.subr.mxu0 0.0
        %340 = vmatpush1.msra.mxu0 1.0
        %341 = vmatprep.subr.mxu0 0.0
        %342 = vmatpush1.msra.mxu0 1.0
        %343 = vmatprep.subr.mxu0 0.0
        %344 = vmatpush1.msra.mxu0 1.0
        %345 = vmatprep.subr.mxu0 0.0
        %346 = vmatpush1.msra.mxu0 1.0
        %347 = vmatprep.subr.mxu0 0.0
        %348 = vmatpush1.msra.mxu0 1.0
        %349 = vmatprep.subr.mxu0 0.0
        %350 = vmatpush1.msra.mxu0 1.0
        %351 = vmatprep.subr.mxu0 0.0
        %352 = vmatpush1.msra.mxu0 1.0
        %353 = vmatprep.subr.mxu0 0.0
        %354 = vmatpush1.msra.mxu0 1.0
        %355 = vmatprep.subr.mxu0 0.0
        %356 = vmatpush1.msra.mxu0 1.0
        %357 = vmatprep.subr.mxu0 0.0
        %358 = vmatpush1.msra.mxu0 1.0
        %359 = vmatprep.subr.mxu0 0.0
        %360 = vmatpush1.msra.mxu0 1.0
        %361 = vmatprep.subr.mxu0 0.0
        %362 = vmatpush1.msra.mxu0 1.0
        %363 = vmatprep.subr.mxu0 0.0
        %364 = vmatpush1.msra.mxu0 1.0
        %365 = vmatprep.subr.mxu0 0.0
        %366 = vmatpush1.msra.mxu0 1.0
        %367 = vmatprep.subr.mxu0 0.0
        %368 = vmatpush1.msra.mxu0 1.0
        %369 = vmatprep.subr.mxu0 0.0
        %370 = vmatpush1.msra.mxu0 1.0
        %371 = vmatprep.subr.mxu0 0.0
        %372 = vmatpush1.msra.mxu0 1.0
        %373 = vmatprep.subr.mxu0 0.0
        %374 = vmatpush1.msra.mxu0 1.0
        %375 = vmatprep.subr.mxu0 0.0
        %376 = vmatpush1.msra.mxu0 1.0
        %377 = vmatprep.mubr.f32.mxu0 %v218
        %378 = vmatmul.mubr.f32.gmra.mrb[0].mxu0 %v217
        %v379 = vpop.f32.mrb[0].mxu0
        %v380 = vadd.f32 0.0, %v379
        %v381 = vpop.f32.mrb[0].mxu0
        %382 = vdwg.mxu0
        %383 = vmatprep.subr.mxu0 0.0
        %384 = vmatpush1.msra.mxu0 1.0
        %385 = vmatprep.subr.mxu0 0.0
        %386 = vmatpush1.msra.mxu0 1.0
        %387 = vmatprep.subr.mxu0 0.0
        %388 = vmatpush1.msra.mxu0 1.0
        %389 = vmatprep.subr.mxu0 0.0
        %390 = vmatpush1.msra.mxu0 1.0
        %391 = vmatprep.subr.mxu0 0.0
        %392 = vmatpush1.msra.mxu0 1.0
        %393 = vmatprep.subr.mxu0 0.0
        %394 = vmatpush1.msra.mxu0 1.0
        %395 = vmatprep.subr.mxu0 0.0
        %396 = vmatpush1.msra.mxu0 1.0
        %397 = vmatprep.subr.mxu0 0.0
        %398 = vmatpush1.msra.mxu0 1.0
        %399 = vmatprep.subr.mxu0 0.0
        %400 = vmatpush1.msra.mxu0 1.0
        %401 = vmatprep.subr.mxu0 0.0
        %402 = vmatpush1.msra.mxu0 1.0
        %403 = vmatprep.subr.mxu0 0.0
        %404 = vmatpush1.msra.mxu0 1.0
        %405 = vmatprep.subr.mxu0 0.0
        %406 = vmatpush1.msra.mxu0 1.0
        %407 = vmatprep.subr.mxu0 0.0
        %408 = vmatpush1.msra.mxu0 1.0
        %409 = vmatprep.subr.mxu0 0.0
        %410 = vmatpush1.msra.mxu0 1.0
        %411 = vmatprep.subr.mxu0 0.0
        %412 = vmatpush1.msra.mxu0 1.0
        %413 = vmatprep.subr.mxu0 0.0
        %414 = vmatpush1.msra.mxu0 1.0
        %415 = vmatprep.subr.mxu0 0.0
        %416 = vmatpush1.msra.mxu0 1.0
        %417 = vmatprep.subr.mxu0 0.0
        %418 = vmatpush1.msra.mxu0 1.0
        %419 = vmatprep.subr.mxu0 0.0
        %420 = vmatpush1.msra.mxu0 1.0
        %421 = vmatprep.subr.mxu0 0.0
        %422 = vmatpush1.msra.mxu0 1.0
        %423 = vmatprep.subr.mxu0 0.0
        %424 = vmatpush1.msra.mxu0 1.0
        %425 = vmatprep.subr.mxu0 0.0
        %426 = vmatpush1.msra.mxu0 1.0
        %427 = vmatprep.subr.mxu0 0.0
        %428 = vmatpush1.msra.mxu0 1.0
        %429 = vmatprep.subr.mxu0 0.0
        %430 = vmatpush1.msra.mxu0 1.0
        %431 = vmatprep.subr.mxu0 0.0
        %432 = vmatpush1.msra.mxu0 1.0
        %433 = vmatprep.subr.mxu0 0.0
        %434 = vmatpush1.msra.mxu0 1.0
        %435 = vmatprep.subr.mxu0 0.0
        %436 = vmatpush1.msra.mxu0 1.0
        %437 = vmatprep.subr.mxu0 0.0
        %438 = vmatpush1.msra.mxu0 1.0
        %439 = vmatprep.subr.mxu0 0.0
        %440 = vmatpush1.msra.mxu0 1.0
        %441 = vmatprep.subr.mxu0 0.0
        %442 = vmatpush1.msra.mxu0 1.0
        %443 = vmatprep.subr.mxu0 0.0
        %444 = vmatpush1.msra.mxu0 1.0
        %445 = vmatprep.subr.mxu0 0.0
        %446 = vmatpush1.msra.mxu0 1.0
        %447 = vmatprep.mubr.f32.mxu0 %v312
        %448 = vmatmul.mubr.f32.gmra.mrb[0].mxu0 %v311
        %v449 = vpop.f32.mrb[0].mxu0
        %v450 = vadd.f32 0.0, %v449
        %v451 = vpop.f32.mrb[0].mxu0
        %452 = vdwg.mxu0
        %v453 = vmul.f32 %v311, %v311
        %v454 = vmul.f32 %v312, %v312
        %455 = vmatprep.subr.mxu0 0.0
        %456 = vmatpush1.msra.mxu0 1.0
        %457 = vmatprep.subr.mxu0 0.0
        %458 = vmatpush1.msra.mxu0 1.0
        %459 = vmatprep.subr.mxu0 0.0
        %460 = vmatpush1.msra.mxu0 1.0
        %461 = vmatprep.subr.mxu0 0.0
        %462 = vmatpush1.msra.mxu0 1.0
        %463 = vmatprep.subr.mxu0 0.0
        %464 = vmatpush1.msra.mxu0 1.0
        %465 = vmatprep.subr.mxu0 0.0
        %466 = vmatpush1.msra.mxu0 1.0
        %467 = vmatprep.subr.mxu0 0.0
        %468 = vmatpush1.msra.mxu0 1.0
        %469 = vmatprep.subr.mxu0 0.0
        %470 = vmatpush1.msra.mxu0 1.0
        %471 = vmatprep.subr.mxu0 0.0
        %472 = vmatpush1.msra.mxu0 1.0
        %473 = vmatprep.subr.mxu0 0.0
        %474 = vmatpush1.msra.mxu0 1.0
        %475 = vmatprep.subr.mxu0 0.0
        %476 = vmatpush1.msra.mxu0 1.0
        %477 = vmatprep.subr.mxu0 0.0
        %478 = vmatpush1.msra.mxu0 1.0
        %479 = vmatprep.subr.mxu0 0.0
        %480 = vmatpush1.msra.mxu0 1.0
        %481 = vmatprep.subr.mxu0 0.0
        %482 = vmatpush1.msra.mxu0 1.0
        %483 = vmatprep.subr.mxu0 0.0
        %484 = vmatpush1.msra.mxu0 1.0
        %485 = vmatprep.subr.mxu0 0.0
        %486 = vmatpush1.msra.mxu0 1.0
        %487 = vmatprep.subr.mxu0 0.0
        %488 = vmatpush1.msra.mxu0 1.0
        %489 = vmatprep.subr.mxu0 0.0
        %490 = vmatpush1.msra.mxu0 1.0
        %491 = vmatprep.subr.mxu0 0.0
        %492 = vmatpush1.msra.mxu0 1.0
        %493 = vmatprep.subr.mxu0 0.0
        %494 = vmatpush1.msra.mxu0 1.0
        %495 = vmatprep.subr.mxu0 0.0
        %496 = vmatpush1.msra.mxu0 1.0
        %497 = vmatprep.subr.mxu0 0.0
        %498 = vmatpush1.msra.mxu0 1.0
        %499 = vmatprep.subr.mxu0 0.0
        %500 = vmatpush1.msra.mxu0 1.0
        %501 = vmatprep.subr.mxu0 0.0
        %502 = vmatpush1.msra.mxu0 1.0
        %503 = vmatprep.subr.mxu0 0.0
        %504 = vmatpush1.msra.mxu0 1.0
        %505 = vmatprep.subr.mxu0 0.0
        %506 = vmatpush1.msra.mxu0 1.0
        %507 = vmatprep.subr.mxu0 0.0
        %508 = vmatpush1.msra.mxu0 1.0
        %509 = vmatprep.subr.mxu0 0.0
        %510 = vmatpush1.msra.mxu0 1.0
        %511 = vmatprep.subr.mxu0 0.0
        %512 = vmatpush1.msra.mxu0 1.0
        %513 = vmatprep.subr.mxu0 0.0
        %514 = vmatpush1.msra.mxu0 1.0
        %515 = vmatprep.subr.mxu0 0.0
        %516 = vmatpush1.msra.mxu0 1.0
        %517 = vmatprep.subr.mxu0 0.0
        %518 = vmatpush1.msra.mxu0 1.0
        %519 = vmatprep.mubr.f32.mxu0 %v454
        %520 = vmatmul.mubr.f32.gmra.mrb[0].mxu0 %v453
        %v521 = vpop.f32.mrb[0].mxu0
        %v522 = vadd.f32 0.0, %v521
        %v523 = vpop.f32.mrb[0].mxu0
        %524 = vdwg.mxu0
        %v525 = vmul.f32 %v311, %v217
        %v526 = vmul.f32 %v312, %v218
        %527 = vmatprep.subr.mxu0 0.0
        %528 = vmatpush1.msra.mxu0 1.0
        %529 = vmatprep.subr.mxu0 0.0
        %530 = vmatpush1.msra.mxu0 1.0
        %531 = vmatprep.subr.mxu0 0.0
        %532 = vmatpush1.msra.mxu0 1.0
        %533 = vmatprep.subr.mxu0 0.0
        %534 = vmatpush1.msra.mxu0 1.0
        %535 = vmatprep.subr.mxu0 0.0
        %536 = vmatpush1.msra.mxu0 1.0
        %537 = vmatprep.subr.mxu0 0.0
        %538 = vmatpush1.msra.mxu0 1.0
        %539 = vmatprep.subr.mxu0 0.0
        %540 = vmatpush1.msra.mxu0 1.0
        %541 = vmatprep.subr.mxu0 0.0
        %542 = vmatpush1.msra.mxu0 1.0
        %543 = vmatprep.subr.mxu0 0.0
        %544 = vmatpush1.msra.mxu0 1.0
        %545 = vmatprep.subr.mxu0 0.0
        %546 = vmatpush1.msra.mxu0 1.0
        %547 = vmatprep.subr.mxu0 0.0
        %548 = vmatpush1.msra.mxu0 1.0
        %549 = vmatprep.subr.mxu0 0.0
        %550 = vmatpush1.msra.mxu0 1.0
        %551 = vmatprep.subr.mxu0 0.0
        %552 = vmatpush1.msra.mxu0 1.0
        %553 = vmatprep.subr.mxu0 0.0
        %554 = vmatpush1.msra.mxu0 1.0
        %555 = vmatprep.subr.mxu0 0.0
        %556 = vmatpush1.msra.mxu0 1.0
        %557 = vmatprep.subr.mxu0 0.0
        %558 = vmatpush1.msra.mxu0 1.0
        %559 = vmatprep.subr.mxu0 0.0
        %560 = vmatpush1.msra.mxu0 1.0
        %561 = vmatprep.subr.mxu0 0.0
        %562 = vmatpush1.msra.mxu0 1.0
        %563 = vmatprep.subr.mxu0 0.0
        %564 = vmatpush1.msra.mxu0 1.0
        %565 = vmatprep.subr.mxu0 0.0
        %566 = vmatpush1.msra.mxu0 1.0
        %567 = vmatprep.subr.mxu0 0.0
        %568 = vmatpush1.msra.mxu0 1.0
        %569 = vmatprep.subr.mxu0 0.0
        %570 = vmatpush1.msra.mxu0 1.0
        %571 = vmatprep.subr.mxu0 0.0
        %572 = vmatpush1.msra.mxu0 1.0
        %573 = vmatprep.subr.mxu0 0.0
        %574 = vmatpush1.msra.mxu0 1.0
        %575 = vmatprep.subr.mxu0 0.0
        %576 = vmatpush1.msra.mxu0 1.0
        %577 = vmatprep.subr.mxu0 0.0
        %578 = vmatpush1.msra.mxu0 1.0
        %579 = vmatprep.subr.mxu0 0.0
        %580 = vmatpush1.msra.mxu0 1.0
        %581 = vmatprep.subr.mxu0 0.0
        %582 = vmatpush1.msra.mxu0 1.0
        %583 = vmatprep.subr.mxu0 0.0
        %584 = vmatpush1.msra.mxu0 1.0
        %585 = vmatprep.subr.mxu0 0.0
        %586 = vmatpush1.msra.mxu0 1.0
        %587 = vmatprep.subr.mxu0 0.0
        %588 = vmatpush1.msra.mxu0 1.0
        %589 = vmatprep.subr.mxu0 0.0
        %590 = vmatpush1.msra.mxu0 1.0
        %591 = vmatprep.mubr.f32.mxu0 %v526
        %592 = vmatmul.mubr.f32.gmra.mrb[0].mxu0 %v525
        %v593 = vpop.f32.mrb[0].mxu0
        %v594 = vadd.f32 0.0, %v593
        %v595 = vpop.f32.mrb[0].mxu0
        %596 = vdwg.mxu0
        %v597 = vmul.f32 %v217, %v217
        %v598 = vmul.f32 %v218, %v218
        %599 = vmatprep.subr.mxu0 0.0
        %600 = vmatpush1.msra.mxu0 1.0
        %601 = vmatprep.subr.mxu0 0.0
        %602 = vmatpush1.msra.mxu0 1.0
        %603 = vmatprep.subr.mxu0 0.0
        %604 = vmatpush1.msra.mxu0 1.0
        %605 = vmatprep.subr.mxu0 0.0
        %606 = vmatpush1.msra.mxu0 1.0
        %607 = vmatprep.subr.mxu0 0.0
        %608 = vmatpush1.msra.mxu0 1.0
        %609 = vmatprep.subr.mxu0 0.0
        %610 = vmatpush1.msra.mxu0 1.0
        %611 = vmatprep.subr.mxu0 0.0
        %612 = vmatpush1.msra.mxu0 1.0
        %613 = vmatprep.subr.mxu0 0.0
        %614 = vmatpush1.msra.mxu0 1.0
        %615 = vmatprep.subr.mxu0 0.0
        %616 = vmatpush1.msra.mxu0 1.0
        %617 = vmatprep.subr.mxu0 0.0
        %618 = vmatpush1.msra.mxu0 1.0
        %619 = vmatprep.subr.mxu0 0.0
        %620 = vmatpush1.msra.mxu0 1.0
        %621 = vmatprep.subr.mxu0 0.0
        %622 = vmatpush1.msra.mxu0 1.0
        %623 = vmatprep.subr.mxu0 0.0
        %624 = vmatpush1.msra.mxu0 1.0
        %625 = vmatprep.subr.mxu0 0.0
        %626 = vmatpush1.msra.mxu0 1.0
        %627 = vmatprep.subr.mxu0 0.0
        %628 = vmatpush1.msra.mxu0 1.0
        %629 = vmatprep.subr.mxu0 0.0
        %630 = vmatpush1.msra.mxu0 1.0
        %631 = vmatprep.subr.mxu0 0.0
        %632 = vmatpush1.msra.mxu0 1.0
        %633 = vmatprep.subr.mxu0 0.0
        %634 = vmatpush1.msra.mxu0 1.0
        %635 = vmatprep.subr.mxu0 0.0
        %636 = vmatpush1.msra.mxu0 1.0
        %637 = vmatprep.subr.mxu0 0.0
        %638 = vmatpush1.msra.mxu0 1.0
        %639 = vmatprep.subr.mxu0 0.0
        %640 = vmatpush1.msra.mxu0 1.0
        %641 = vmatprep.subr.mxu0 0.0
        %642 = vmatpush1.msra.mxu0 1.0
        %643 = vmatprep.subr.mxu0 0.0
        %644 = vmatpush1.msra.mxu0 1.0
        %645 = vmatprep.subr.mxu0 0.0
        %646 = vmatpush1.msra.mxu0 1.0
        %647 = vmatprep.subr.mxu0 0.0
        %648 = vmatpush1.msra.mxu0 1.0
        %649 = vmatprep.subr.mxu0 0.0
        %650 = vmatpush1.msra.mxu0 1.0
        %651 = vmatprep.subr.mxu0 0.0
        %652 = vmatpush1.msra.mxu0 1.0
        %653 = vmatprep.subr.mxu0 0.0
        %654 = vmatpush1.msra.mxu0 1.0
        %655 = vmatprep.subr.mxu0 0.0
        %656 = vmatpush1.msra.mxu0 1.0
        %657 = vmatprep.subr.mxu0 0.0
        %658 = vmatpush1.msra.mxu0 1.0
        %659 = vmatprep.subr.mxu0 0.0
        %660 = vmatpush1.msra.mxu0 1.0
        %661 = vmatprep.subr.mxu0 0.0
        %662 = vmatpush1.msra.mxu0 1.0
        %663 = vmatprep.mubr.f32.mxu0 %v598
        %664 = vmatmul.mubr.f32.gmra.mrb[0].mxu0 %v597
        %v665 = vpop.f32.mrb[0].mxu0
        %v666 = vadd.f32 0.0, %v665
        %v667 = vpop.f32.mrb[0].mxu0
        %668 = vdwg.mxu0
        %670 = vrot.lane.b32.xlu0 %v450, 1
        %v671 = vpop.permute.xlu0 %670
        %674 = vrot.lane.b32.xlu0 %v522, 2
        %v675 = vpop.permute.xlu0 %674
        %678 = vrot.lane.b32.xlu0 %v594, 3
        %v679 = vpop.permute.xlu0 %678
        %682 = vrot.lane.b32.xlu0 %v666, 4
        %v683 = vpop.permute.xlu0 %682
        %vm685 = vcmask 7168
        %v686 = vsel %vm685, %v380, %v671
        %vm687 = vcmask 15360
        %v688 = vsel %vm687, %v686, %v675
        %vm689 = vcmask 23552
        %v690 = vsel %vm689, %v688, %v679
        %vm691 = vcmask 31744
        %v692 = vsel %vm691, %v690, %v683
        %vm693 = vcmask 39936
        %v694 = vsel %vm693, %v692, 0.0
        %p695 = scmp.eq.s32.totalorder %s27, 0
        // Predicated region
        $region37: #{tpu_custom_call.1} parent=31 // pred_check
          %p696 = pneg %p695
        $region38: #{tpu_custom_call.1} parent=31 // pred_check_branch
          %698 = sbr.rel (%p696) target = $region40
        $region39: #{tpu_custom_call.1} parent=31 // pred_region
          %699 = vst.msk [vmem:[%s214] sm:$0xff] %vm226, 0.0
        $region40: #{tpu_custom_call.1} parent=31 // pred_fallthru
          _
        %v700 = vld [vmem:[%s214] sm:$0xff]
        %v701 = vadd.f32 %v700, %v694
        %702 = vst.msk [vmem:[%s214] sm:$0xff] %vm226, %v701
        %s703 = sand.u32 %s121, 1
        %s704 = scalar_lea.sflag [#allocation4], %s703
        %s705 = sand.u32 %s121, 1
        %s706 = smul.addr %s705, 8
        %s707 = scalar_lea.vmem [#allocation5], %s706
        // Predicated region
        $region41: #{tpu_custom_call.1} parent=31 // pred_check
          %p708 = pneg %p131
        $region42: #{tpu_custom_call.1} parent=31 // pred_check_branch
          %710 = sbr.rel (%p708) target = $region44
        $region43: #{tpu_custom_call.1} parent=31 // pred_region
          %s712 = ssub.s32 128, 128
          %713 = vsyncadd %s704, %s712
          %s714 = sadd.s32 %s26, %s25
          %s715 = smul.addr %s714, 128
          %s716 = scalar_lea.hbm %s3, %s715
          %s718 = sshll.u32 %s707, 4
          %s719 = int_to_ptr.vmem [resolvable:$true] %s718
          %721 = dma.vmem_to_hbm [thread:$0]  %s719, 128, %s716, %s704
        $region44: #{tpu_custom_call.1} parent=31 // pred_fallthru
          _
      $region32: #{tpu_custom_call.1} parent=5 // pred_fallthru
        _
      %p722 = scmp.le.s32.totalorder 2, %s15
      // Predicated region
      $region45: #{tpu_custom_call.1} parent=5 // pred_check
        %p723 = pneg %p722
      $region46: #{tpu_custom_call.1} parent=5 // pred_check_branch
        %725 = sbr.rel (%p723) target = $region48
      $region47: #{tpu_custom_call.1} parent=5 // pred_region
        %s726 = ssub.s32 %s15, 2
        // Predicated region
        $region49: #{tpu_custom_call.1} parent=47 // pred_check
          %p727 = pneg %p137
        $region50: #{tpu_custom_call.1} parent=47 // pred_check_branch
          %729 = sbr.rel (%p727) target = $region52
        $region51: #{tpu_custom_call.1} parent=47 // pred_region
          %s730 = sand.u32 %s122, 1
          %s731 = scalar_lea.sflag [#allocation4], %s730
          %s732 = sand.u32 %s122, 1
          %s733 = smul.addr %s732, 8
          %s734 = scalar_lea.vmem [#allocation5], %s733
          %735 = dma.done %s731, 128
        $region52: #{tpu_custom_call.1} parent=47 // pred_fallthru
          _
      $region48: #{tpu_custom_call.1} parent=5 // pred_fallthru
        _
    $region6: #{tpu_custom_call.1} parent=1 // loop_footer
      %s19 = sadd.s32 1, %s15
    $region7: #{tpu_custom_call.1} parent=1 // loop_footer_branch
      %14 = sbr.rel target = $region3
    $region8: #{tpu_custom_call.1} parent=1 // loop_exit
      _
    %736 = vsyncpa [#allocation3], 1
    %s737 = scalar_lea.sflag [#allocation3], 1
    %738 = vsyncpa %s737, 1
    %739 = vsyncpa [#allocation4], 1
    %s740 = scalar_lea.sflag [#allocation4], 1
    %741 = vsyncpa %s740, 1

</llo_original>
